<compile_context>
chip_gen: v6e
topology: v6e:2x2x1
jax: 0.10.0
libtpu: 0.0.40
codegen_flags: <defaults>
</compile_context>

<pallas_src>
import functools

import jax
import jax.numpy as jnp
from jax.experimental import pallas as pl
from jax.experimental.pallas import tpu as pltpu

EPS = 1e-6  # siglip layer_norm_eps default


def _gelu_tanh(x):
    # "gelu_pytorch_tanh" activation (SigLIP hidden_act), kept in f32.
    c = 0.7978845608028654  # sqrt(2/pi)
    return 0.5 * x * (1.0 + jnp.tanh(c * (x + 0.044715 * x * x * x)))


def _standardize(x, eps=EPS):
    mu = jnp.mean(x, axis=-1, keepdims=True)
    var = jnp.mean((x - mu) ** 2, axis=-1, keepdims=True)
    return (x - mu) * jax.lax.rsqrt(var + eps)


def _layer_norm(x, w, b, eps=EPS):  # used by the pure-JAX reference only
    return _standardize(x, eps) * w + b


# --------------------------------------------------------------------------
# Kernel A: LayerNorm1 + fused qkv projection for one (batch, query-tile).
# Output is written directly in per-head (3H, tq, hd) layout.
# --------------------------------------------------------------------------
def _ln_qkv_kernel(num_heads, head_dim, x_ref, wqkv_ref, bqkv_ref, qkv_ref):
    # LN1 gamma/beta and the softmax scale are pre-folded into wqkv/bqkv, so
    # only the standardization runs here (f32).
    xhat = _standardize(x_ref[0].astype(jnp.float32))          # (tq, D)
    qkv = jnp.dot(xhat.astype(wqkv_ref.dtype), wqkv_ref[...],
                  preferred_element_type=jnp.float32) + bqkv_ref[...]
    qkv = qkv.astype(qkv_ref.dtype)                             # (tq, 3D) bf16
    # Head split in VMEM: copy static lane slices into the (3H, tq, hd) output
    # block (unrolled; pure layout plumbing, no HBM relayout downstream).
    for c in range(3 * num_heads):
        qkv_ref[0, c] = qkv[:, c * head_dim:(c + 1) * head_dim]


# --------------------------------------------------------------------------
# Kernel B: attention (heads batched) + out-proj + residual + LN2 + MLP.
# --------------------------------------------------------------------------
def _attn_mlp_kernel(seq_len, seq_pad, x_ref, q_ref, k_ref, v_ref,
                     wo_ref, bo_ref, w1_ref, b1_ref, w2_ref, b2_ref, out_ref):
    f32 = jnp.float32
    q = q_ref[0]                               # (H, tq, hd) bf16 (pre-scaled)
    k = k_ref[0]                               # (H, S_pad, hd) bf16
    v = v_ref[0]                               # (H, S_pad, hd) bf16
    num_heads = q.shape[0]

    # All heads in one leading-batch MXU contraction; softmax math stays f32.
    s = jnp.einsum("hqd,hkd->hqk", q, k,
                   preferred_element_type=f32)                  # (H, tq, S_pad)
    if seq_pad != seq_len:                     # mask padded key positions
        kidx = jax.lax.broadcasted_iota(jnp.int32, s.shape, 2)
        s = jnp.where(kidx < seq_len, s, jnp.float32(-1e30))
    s = s - jnp.max(s, axis=-1, keepdims=True)
    p = jnp.exp(s)
    denom = jnp.sum(p, axis=-1, keepdims=True)                  # (H, tq, 1)

    o = jnp.einsum("hqk,hkd->hqd", p.astype(v.dtype), v,
                   preferred_element_type=f32)                  # (H, tq, hd)
    # Normalize AFTER the PV matmul: (H, tq, hd) multiply instead of
    # (H, tq, S); reciprocal goes to the EUP slot.
    o = o * pl.reciprocal(denom, approx=True)
    o = o.astype(wo_ref.dtype)

    # Merge heads in VMEM (lane concat of leading-dim slices) and run the
    # out-projection as ONE full-contraction-depth (tq, D) @ (D, D) matmul.
    o_merged = jnp.concatenate([o[h] for h in range(num_heads)], axis=-1)
    attn = jnp.dot(o_merged, wo_ref[...],
                   preferred_element_type=f32) + bo_ref[...]

    x = x_ref[0].astype(f32) + attn            # residual 1 (f32)

    # LN2 gamma/beta are folded into w1/b1 -> plain standardization here.
    h = _standardize(x)
    h = jnp.dot(h.astype(w1_ref.dtype), w1_ref[...],
                preferred_element_type=f32) + b1_ref[...]
    h = _gelu_tanh(h)
    h = jnp.dot(h.astype(w2_ref.dtype), w2_ref[...],
                preferred_element_type=f32) + b2_ref[...]
    out_ref[0] = (x + h).astype(out_ref.dtype)  # residual 2


# --------------------------------------------------------------------------
# Wrapper
# --------------------------------------------------------------------------
def _round_up(value, multiple):
    return (value + multiple - 1) // multiple * multiple


def _default_q_block():
    # 256 where VMEM is plentiful (v5e/v6e: 128 MiB), 128 on v7x (64 MiB).
    try:
        vmem = int(pltpu.get_tpu_info().vmem_capacity_bytes)
        return 256 if vmem >= 100 * 1024 * 1024 else 128
    except Exception:
        return 128


def _vmem_limit_bytes():
    # Raise the scoped-VMEM ceiling but stay well under physical capacity.
    try:
        return int(pltpu.get_tpu_info().vmem_capacity_bytes) * 3 // 4
    except Exception:
        return 64 * 1024 * 1024


def _single_buffered():
    # Constant-index operands only need a single VMEM buffer.
    try:
        return pl.Buffered(1)
    except Exception:
        return None  # fall back to the default pipelining mode


def siglip2_encoder_layer(x, params, num_heads, *, q_block=None,
                          compute_dtype=jnp.bfloat16):
    B, S, D = x.shape
    head_dim = D // num_heads
    assert head_dim * num_heads == D
    inter = params["w1"].shape[1]
    f32 = jnp.float32

    # --- sequence tiling / padding -------------------------------------------
    tq = q_block if q_block is not None else _default_q_block()
    if S <= tq:
        tq = _round_up(S, 8)       # single sublane-aligned tile
    s_pad = _round_up(S, tq)
    nq = s_pad // tq
    x_pad = x if s_pad == S else jnp.pad(x, ((0, 0), (0, s_pad - S), (0, 0)))

    vmem_limit = _vmem_limit_bytes()
    buf1 = _single_buffered()

    # --- trace-time weight preprocessing (free) -------------------------------
    # Fold LN1 gamma/beta and the softmax scale into the fused QKV projection:
    #   LN1(x) @ W + b = xhat @ (gamma[:,None] * W) + (beta @ W + b)
    # and the q columns additionally absorb head_dim ** -0.5.
    scale = head_dim ** -0.5
    col_scale = jnp.concatenate(
        [jnp.full((D,), scale, f32), jnp.ones((2 * D,), f32)])
    gamma1 = params["ln1_w"].astype(f32).reshape(-1)
    beta1 = params["ln1_b"].astype(f32).reshape(-1)
    wqkv_f32 = params["wqkv"].astype(f32)
    wqkv = (gamma1[:, None] * wqkv_f32 * col_scale[None, :]).astype(compute_dtype)
    bqkv = ((beta1 @ wqkv_f32 + params["bqkv"].astype(f32).reshape(-1))
            * col_scale).reshape(1, 3 * D)

    # Fold LN2 gamma/beta into fc1.
    gamma2 = params["ln2_w"].astype(f32).reshape(-1)
    beta2 = params["ln2_b"].astype(f32).reshape(-1)
    w1_f32 = params["w1"].astype(f32)
    w1 = (gamma2[:, None] * w1_f32).astype(compute_dtype)
    b1 = (beta2 @ w1_f32 + params["b1"].astype(f32).reshape(-1)).reshape(1, inter)

    wo = params["wo"].astype(compute_dtype)                 # (D, D): full depth
    bo = params["bo"].astype(f32).reshape(1, D)
    w2 = params["w2"].astype(compute_dtype)
    b2 = params["b2"].astype(f32).reshape(1, D)

    def const(shape):
        n = len(shape)
        return pl.BlockSpec(shape, lambda b, i, _n=n: (0,) * _n,
                            pipeline_mode=buf1)

    # ---- Kernel A: LN1 + fused qkv projection (per-head output layout) -------
    qkv3 = pl.pallas_call(
        functools.partial(_ln_qkv_kernel, num_heads, head_dim),
        out_shape=jax.ShapeDtypeStruct((B, 3 * num_heads, s_pad, head_dim),
                                       compute_dtype),
        grid_spec=pltpu.PrefetchScalarGridSpec(
            num_scalar_prefetch=0,
            grid=(B, nq),
            in_specs=[
                pl.BlockSpec((1, tq, D), lambda b, i: (b, i, 0)),   # x tile
                const((D, 3 * D)),                                   # Wqkv
                const((1, 3 * D)),                                   # bqkv
            ],
            out_specs=pl.BlockSpec((1, 3 * num_heads, tq, head_dim),
                                   lambda b, i: (b, 0, i, 0)),
        ),
        compiler_params=pltpu.CompilerParams(
            dimension_semantics=("parallel", "parallel"),
            vmem_limit_bytes=vmem_limit),
    )(x_pad, wqkv, bqkv)

    # ---- Kernel B: attention + out-proj + residual + LN2 + MLP + residual ----
    # q / k / v are read as head-blocks 0 / 1 / 2 of the SAME qkv3 array, so no
    # XLA relayout (and no extra HBM round-trip) happens between the kernels.
    out_pad = pl.pallas_call(
        functools.partial(_attn_mlp_kernel, S, s_pad),
        out_shape=jax.ShapeDtypeStruct((B, s_pad, D), x.dtype),
        grid_spec=pltpu.PrefetchScalarGridSpec(
            num_scalar_prefetch=0,
            grid=(B, nq),
            in_specs=[
                pl.BlockSpec((1, tq, D), lambda b, i: (b, i, 0)),            # x
                pl.BlockSpec((1, num_heads, tq, head_dim),
                             lambda b, i: (b, 0, i, 0)),                     # q
                pl.BlockSpec((1, num_heads, s_pad, head_dim),
                             lambda b, i: (b, 1, 0, 0), pipeline_mode=buf1),  # k
                pl.BlockSpec((1, num_heads, s_pad, head_dim),
                             lambda b, i: (b, 2, 0, 0), pipeline_mode=buf1),  # v
                const((D, D)), const((1, D)),             # out-proj W, b
                const((D, inter)), const((1, inter)),     # fc1 (LN2-folded)
                const((inter, D)), const((1, D)),         # fc2
            ],
            out_specs=pl.BlockSpec((1, tq, D), lambda b, i: (b, i, 0)),
        ),
        compiler_params=pltpu.CompilerParams(
            dimension_semantics=("parallel", "parallel"),
            vmem_limit_bytes=vmem_limit),
        # When stacking layers with donated inputs, input_output_aliases={0: 0}
        # would let the output reuse x's HBM buffer (not enabled here because
        # the demo re-reads x for the reference check).
    )(x_pad, qkv3, qkv3, qkv3, wo, bo, w1, b1, w2, b2)

    return out_pad if s_pad == S else out_pad[:, :S, :]


# --------------------------------------------------------------------------
# Pure-JAX f32 reference (same math as the PyTorch module).
# --------------------------------------------------------------------------
def reference_encoder_layer(x, params, num_heads):
    B, S, D = x.shape
    head_dim = D // num_heads
    scale = head_dim ** -0.5

    h = _layer_norm(x, params["ln1_w"], params["ln1_b"])
    qkv = h @ params["wqkv"] + params["bqkv"]
    q, k, v = jnp.split(qkv, 3, axis=-1)
    q = q.reshape(B, S, num_heads, head_dim)
    k = k.reshape(B, S, num_heads, head_dim)
    v = v.reshape(B, S, num_heads, head_dim)
    s = jnp.einsum("bqhd,bkhd->bhqk", q, k) * scale
    p = jax.nn.softmax(s, axis=-1)
    o = jnp.einsum("bhqk,bkhd->bqhd", p, v).reshape(B, S, D)
    attn = o @ params["wo"] + params["bo"]
    x = x + attn

    h = _layer_norm(x, params["ln2_w"], params["ln2_b"])
    h = h @ params["w1"] + params["b1"]
    h = _gelu_tanh(h)
    h = h @ params["w2"] + params["b2"]
    return x + h


if __name__ == "__main__":
    def make_params(key, D, I):
        keys = jax.random.split(key, 11)
        params = {
            "ln1_w": jnp.ones((1, D), jnp.float32),
            "ln1_b": jnp.zeros((1, D), jnp.float32),
            "wqkv": 0.05 * jax.random.normal(keys[0], (D, 3 * D), jnp.float32),
            "bqkv": 0.01 * jax.random.normal(keys[1], (1, 3 * D), jnp.float32),
            "wo":   0.05 * jax.random.normal(keys[2], (D, D), jnp.float32),
            "bo":   0.01 * jax.random.normal(keys[3], (1, D), jnp.float32),
            "ln2_w": jnp.ones((1, D), jnp.float32)
                     + 0.1 * jax.random.normal(keys[4], (1, D), jnp.float32),
            "ln2_b": 0.01 * jax.random.normal(keys[5], (1, D), jnp.float32),
            "w1":   0.05 * jax.random.normal(keys[6], (D, I), jnp.float32),
            "b1":   0.01 * jax.random.normal(keys[7], (1, I), jnp.float32),
            "w2":   0.05 * jax.random.normal(keys[8], (I, D), jnp.float32),
            "b2":   0.01 * jax.random.normal(keys[9], (1, D), jnp.float32),
        }
        return params, keys[10]

    # Case 1: small aligned config (batch=2, seq=8, hidden=32, heads=4, mlp=64).
    B, S, D, H, I = 2, 8, 32, 4, 64
    params, xkey = make_params(jax.random.PRNGKey(0), D, I)
    x = jax.random.normal(xkey, (B, S, D), jnp.float32)

    out = jax.block_until_ready(siglip2_encoder_layer(x, params, num_heads=H))
    ref = reference_encoder_layer(x, params, num_heads=H)
    assert out.shape == (B, S, D)
    err = float(jnp.max(jnp.abs(out - ref)))
    # Matmuls run in bf16 (f32 accumulation) -> bf16-level tolerance.
    assert jnp.allclose(out, ref, rtol=2e-2, atol=2e-2), \
        f"case1 mismatch vs JAX reference (max abs err {err})"

    # Case 2: sequence length not a multiple of the tile -> exercises the
    # padding + padded-key masking path (SigLIP so400m/378px has S=729).
    B2, S2 = 1, 12
    params2, xkey2 = make_params(jax.random.PRNGKey(1), D, I)
    x2 = jax.random.normal(xkey2, (B2, S2, D), jnp.float32)
    out2 = jax.block_until_ready(siglip2_encoder_layer(x2, params2, num_heads=H))
    ref2 = reference_encoder_layer(x2, params2, num_heads=H)
    assert out2.shape == (B2, S2, D)
    err2 = float(jnp.max(jnp.abs(out2 - ref2)))
    assert jnp.allclose(out2, ref2, rtol=2e-2, atol=2e-2), \
        f"case2 mismatch vs JAX reference (max abs err {err2})"

    print("KERNEL_OK")
</pallas_src>

<mosaic_0001>
module attributes {stable_mosaic.version = 11 : i64} {
  func.func @_ln_qkv_kernel(%arg0: i32, %arg1: i32, %arg2: memref<1x8x32xf32, #tpu.memory_space<vmem>>, %arg3: memref<32x96xbf16, #tpu.memory_space<vmem>>, %arg4: memref<1x96xf32, #tpu.memory_space<vmem>>, %arg5: memref<1x12x8x8xbf16, #tpu.memory_space<vmem>>) attributes {dimension_semantics = [#tpu.dimension_semantics<parallel>, #tpu.dimension_semantics<parallel>], iteration_bounds = array<i64: 2, 1>, scalar_prefetch = 0 : i64, scratch_operands = 0 : i64, tpu.core_type = #tpu.core_type<tc>, window_params = [{transform_indices = @transform_0, window_bounds = array<i64: 1, 8, 32>}, {pipeline_mode = #tpu.pipeline_mode<synchronous>, transform_indices = @transform_1, window_bounds = array<i64: 32, 96>}, {pipeline_mode = #tpu.pipeline_mode<synchronous>, transform_indices = @transform_2, window_bounds = array<i64: 1, 96>}, {transform_indices = @transform_3, window_bounds = array<i64: 1, 12, 8, 8>}]} {
    %c0 = arith.constant 0 : index
    %c0_0 = arith.constant 0 : index
    %c0_1 = arith.constant 0 : index
    %0 = vector.load %arg2[%c0, %c0_0, %c0_1] : memref<1x8x32xf32, #tpu.memory_space<vmem>>, vector<1x8x32xf32>
    %1 = vector.shape_cast %0 : vector<1x8x32xf32> to vector<8x32xf32>
    %cst = arith.constant dense<0.000000e+00> : vector<8xf32>
    %2 = vector.multi_reduction <add>, %1, %cst [1] : vector<8x32xf32> to vector<8xf32>
    %3 = vector.shape_cast %2 : vector<8xf32> to vector<8x1xf32>
    %cst_2 = arith.constant 3.200000e+01 : f32
    %4 = vector.broadcast %cst_2 : f32 to vector<8x1xf32>
    %5 = arith.divf %3, %4 : vector<8x1xf32>
    %6 = vector.broadcast %5 : vector<8x1xf32> to vector<8x32xf32>
    %7 = arith.subf %1, %6 : vector<8x32xf32>
    %8 = arith.mulf %7, %7 : vector<8x32xf32>
    %cst_3 = arith.constant dense<0.000000e+00> : vector<8xf32>
    %9 = vector.multi_reduction <add>, %8, %cst_3 [1] : vector<8x32xf32> to vector<8xf32>
    %10 = vector.shape_cast %9 : vector<8xf32> to vector<8x1xf32>
    %cst_4 = arith.constant 3.200000e+01 : f32
    %11 = vector.broadcast %cst_4 : f32 to vector<8x1xf32>
    %12 = arith.divf %10, %11 : vector<8x1xf32>
    %13 = vector.broadcast %5 : vector<8x1xf32> to vector<8x32xf32>
    %14 = arith.subf %1, %13 : vector<8x32xf32>
    %cst_5 = arith.constant 9.99999997E-7 : f32
    %15 = vector.broadcast %cst_5 : f32 to vector<8x1xf32>
    %16 = arith.addf %12, %15 : vector<8x1xf32>
    %17 = math.rsqrt %16 : vector<8x1xf32>
    %18 = vector.broadcast %17 : vector<8x1xf32> to vector<8x32xf32>
    %19 = arith.mulf %14, %18 : vector<8x32xf32>
    %20 = arith.truncf %19 : vector<8x32xf32> to vector<8x32xbf16>
    %c0_6 = arith.constant 0 : index
    %c0_7 = arith.constant 0 : index
    %21 = vector.load %arg3[%c0_6, %c0_7] : memref<32x96xbf16, #tpu.memory_space<vmem>>, vector<32x96xbf16>
    %cst_8 = arith.constant dense<0.000000e+00> : vector<8x96xf32>
    %22 = tpu.matmul %20, %21, %cst_8 {dimension_numbers = #tpu.dot_dimension_numbers<[1], [0], [0], [1], [0, 0, 1, 1], [], []>} : vector<8x32xbf16>, vector<32x96xbf16>, vector<8x96xf32> -> vector<8x96xf32>
    %c0_9 = arith.constant 0 : index
    %c0_10 = arith.constant 0 : index
    %23 = vector.load %arg4[%c0_9, %c0_10] : memref<1x96xf32, #tpu.memory_space<vmem>>, vector<1x96xf32>
    %24 = vector.broadcast %23 : vector<1x96xf32> to vector<8x96xf32>
    %25 = arith.addf %22, %24 : vector<8x96xf32>
    %26 = arith.truncf %25 : vector<8x96xf32> to vector<8x96xbf16>
    %27 = vector.extract_strided_slice %26 {offsets = [0, 0], sizes = [8, 8], strides = [1, 1]} : vector<8x96xbf16> to vector<8x8xbf16>
    %c0_11 = arith.constant 0 : index
    %c0_12 = arith.constant 0 : index
    %c0_13 = arith.constant 0 : index
    %c0_14 = arith.constant 0 : index
    %28 = vector.load %arg5[%c0_11, %c0_12, %c0_13, %c0_14] : memref<1x12x8x8xbf16, #tpu.memory_space<vmem>>, vector<1x1x8x8xbf16>
    %29 = vector.shape_cast %28 : vector<1x1x8x8xbf16> to vector<8x8xbf16>
    %30 = vector.shape_cast %27 : vector<8x8xbf16> to vector<1x1x8x8xbf16>
    tpu.vector_store %arg5[%c0_11, %c0_12, %c0_13, %c0_14], %30 {strides = array<i32>} : memref<1x12x8x8xbf16, #tpu.memory_space<vmem>>, vector<1x1x8x8xbf16>,
    %31 = vector.extract_strided_slice %26 {offsets = [0, 8], sizes = [8, 8], strides = [1, 1]} : vector<8x96xbf16> to vector<8x8xbf16>
    %c0_15 = arith.constant 0 : index
    %c1 = arith.constant 1 : index
    %c0_16 = arith.constant 0 : index
    %c0_17 = arith.constant 0 : index
    %32 = vector.load %arg5[%c0_15, %c1, %c0_16, %c0_17] : memref<1x12x8x8xbf16, #tpu.memory_space<vmem>>, vector<1x1x8x8xbf16>
    %33 = vector.shape_cast %32 : vector<1x1x8x8xbf16> to vector<8x8xbf16>
    %34 = vector.shape_cast %31 : vector<8x8xbf16> to vector<1x1x8x8xbf16>
    tpu.vector_store %arg5[%c0_15, %c1, %c0_16, %c0_17], %34 {strides = array<i32>} : memref<1x12x8x8xbf16, #tpu.memory_space<vmem>>, vector<1x1x8x8xbf16>,
    %35 = vector.extract_strided_slice %26 {offsets = [0, 16], sizes = [8, 8], strides = [1, 1]} : vector<8x96xbf16> to vector<8x8xbf16>
    %c0_18 = arith.constant 0 : index
    %c2 = arith.constant 2 : index
    %c0_19 = arith.constant 0 : index
    %c0_20 = arith.constant 0 : index
    %36 = vector.load %arg5[%c0_18, %c2, %c0_19, %c0_20] : memref<1x12x8x8xbf16, #tpu.memory_space<vmem>>, vector<1x1x8x8xbf16>
    %37 = vector.shape_cast %36 : vector<1x1x8x8xbf16> to vector<8x8xbf16>
    %38 = vector.shape_cast %35 : vector<8x8xbf16> to vector<1x1x8x8xbf16>
    tpu.vector_store %arg5[%c0_18, %c2, %c0_19, %c0_20], %38 {strides = array<i32>} : memref<1x12x8x8xbf16, #tpu.memory_space<vmem>>, vector<1x1x8x8xbf16>,
    %39 = vector.extract_strided_slice %26 {offsets = [0, 24], sizes = [8, 8], strides = [1, 1]} : vector<8x96xbf16> to vector<8x8xbf16>
    %c0_21 = arith.constant 0 : index
    %c3 = arith.constant 3 : index
    %c0_22 = arith.constant 0 : index
    %c0_23 = arith.constant 0 : index
    %40 = vector.load %arg5[%c0_21, %c3, %c0_22, %c0_23] : memref<1x12x8x8xbf16, #tpu.memory_space<vmem>>, vector<1x1x8x8xbf16>
    %41 = vector.shape_cast %40 : vector<1x1x8x8xbf16> to vector<8x8xbf16>
    %42 = vector.shape_cast %39 : vector<8x8xbf16> to vector<1x1x8x8xbf16>
    tpu.vector_store %arg5[%c0_21, %c3, %c0_22, %c0_23], %42 {strides = array<i32>} : memref<1x12x8x8xbf16, #tpu.memory_space<vmem>>, vector<1x1x8x8xbf16>,
    %43 = vector.extract_strided_slice %26 {offsets = [0, 32], sizes = [8, 8], strides = [1, 1]} : vector<8x96xbf16> to vector<8x8xbf16>
    %c0_24 = arith.constant 0 : index
    %c4 = arith.constant 4 : index
    %c0_25 = arith.constant 0 : index
    %c0_26 = arith.constant 0 : index
    %44 = vector.load %arg5[%c0_24, %c4, %c0_25, %c0_26] : memref<1x12x8x8xbf16, #tpu.memory_space<vmem>>, vector<1x1x8x8xbf16>
    %45 = vector.shape_cast %44 : vector<1x1x8x8xbf16> to vector<8x8xbf16>
    %46 = vector.shape_cast %43 : vector<8x8xbf16> to vector<1x1x8x8xbf16>
    tpu.vector_store %arg5[%c0_24, %c4, %c0_25, %c0_26], %46 {strides = array<i32>} : memref<1x12x8x8xbf16, #tpu.memory_space<vmem>>, vector<1x1x8x8xbf16>,
    %47 = vector.extract_strided_slice %26 {offsets = [0, 40], sizes = [8, 8], strides = [1, 1]} : vector<8x96xbf16> to vector<8x8xbf16>
    %c0_27 = arith.constant 0 : index
    %c5 = arith.constant 5 : index
    %c0_28 = arith.constant 0 : index
    %c0_29 = arith.constant 0 : index
    %48 = vector.load %arg5[%c0_27, %c5, %c0_28, %c0_29] : memref<1x12x8x8xbf16, #tpu.memory_space<vmem>>, vector<1x1x8x8xbf16>
    %49 = vector.shape_cast %48 : vector<1x1x8x8xbf16> to vector<8x8xbf16>
    %50 = vector.shape_cast %47 : vector<8x8xbf16> to vector<1x1x8x8xbf16>
    tpu.vector_store %arg5[%c0_27, %c5, %c0_28, %c0_29], %50 {strides = array<i32>} : memref<1x12x8x8xbf16, #tpu.memory_space<vmem>>, vector<1x1x8x8xbf16>,
    %51 = vector.extract_strided_slice %26 {offsets = [0, 48], sizes = [8, 8], strides = [1, 1]} : vector<8x96xbf16> to vector<8x8xbf16>
    %c0_30 = arith.constant 0 : index
    %c6 = arith.constant 6 : index
    %c0_31 = arith.constant 0 : index
    %c0_32 = arith.constant 0 : index
    %52 = vector.load %arg5[%c0_30, %c6, %c0_31, %c0_32] : memref<1x12x8x8xbf16, #tpu.memory_space<vmem>>, vector<1x1x8x8xbf16>
    %53 = vector.shape_cast %52 : vector<1x1x8x8xbf16> to vector<8x8xbf16>
    %54 = vector.shape_cast %51 : vector<8x8xbf16> to vector<1x1x8x8xbf16>
    tpu.vector_store %arg5[%c0_30, %c6, %c0_31, %c0_32], %54 {strides = array<i32>} : memref<1x12x8x8xbf16, #tpu.memory_space<vmem>>, vector<1x1x8x8xbf16>,
    %55 = vector.extract_strided_slice %26 {offsets = [0, 56], sizes = [8, 8], strides = [1, 1]} : vector<8x96xbf16> to vector<8x8xbf16>
    %c0_33 = arith.constant 0 : index
    %c7 = arith.constant 7 : index
    %c0_34 = arith.constant 0 : index
    %c0_35 = arith.constant 0 : index
    %56 = vector.load %arg5[%c0_33, %c7, %c0_34, %c0_35] : memref<1x12x8x8xbf16, #tpu.memory_space<vmem>>, vector<1x1x8x8xbf16>
    %57 = vector.shape_cast %56 : vector<1x1x8x8xbf16> to vector<8x8xbf16>
    %58 = vector.shape_cast %55 : vector<8x8xbf16> to vector<1x1x8x8xbf16>
    tpu.vector_store %arg5[%c0_33, %c7, %c0_34, %c0_35], %58 {strides = array<i32>} : memref<1x12x8x8xbf16, #tpu.memory_space<vmem>>, vector<1x1x8x8xbf16>,
    %59 = vector.extract_strided_slice %26 {offsets = [0, 64], sizes = [8, 8], strides = [1, 1]} : vector<8x96xbf16> to vector<8x8xbf16>
    %c0_36 = arith.constant 0 : index
    %c8 = arith.constant 8 : index
    %c0_37 = arith.constant 0 : index
    %c0_38 = arith.constant 0 : index
    %60 = vector.load %arg5[%c0_36, %c8, %c0_37, %c0_38] : memref<1x12x8x8xbf16, #tpu.memory_space<vmem>>, vector<1x1x8x8xbf16>
    %61 = vector.shape_cast %60 : vector<1x1x8x8xbf16> to vector<8x8xbf16>
    %62 = vector.shape_cast %59 : vector<8x8xbf16> to vector<1x1x8x8xbf16>
    tpu.vector_store %arg5[%c0_36, %c8, %c0_37, %c0_38], %62 {strides = array<i32>} : memref<1x12x8x8xbf16, #tpu.memory_space<vmem>>, vector<1x1x8x8xbf16>,
    %63 = vector.extract_strided_slice %26 {offsets = [0, 72], sizes = [8, 8], strides = [1, 1]} : vector<8x96xbf16> to vector<8x8xbf16>
    %c0_39 = arith.constant 0 : index
    %c9 = arith.constant 9 : index
    %c0_40 = arith.constant 0 : index
    %c0_41 = arith.constant 0 : index
    %64 = vector.load %arg5[%c0_39, %c9, %c0_40, %c0_41] : memref<1x12x8x8xbf16, #tpu.memory_space<vmem>>, vector<1x1x8x8xbf16>
    %65 = vector.shape_cast %64 : vector<1x1x8x8xbf16> to vector<8x8xbf16>
    %66 = vector.shape_cast %63 : vector<8x8xbf16> to vector<1x1x8x8xbf16>
    tpu.vector_store %arg5[%c0_39, %c9, %c0_40, %c0_41], %66 {strides = array<i32>} : memref<1x12x8x8xbf16, #tpu.memory_space<vmem>>, vector<1x1x8x8xbf16>,
    %67 = vector.extract_strided_slice %26 {offsets = [0, 80], sizes = [8, 8], strides = [1, 1]} : vector<8x96xbf16> to vector<8x8xbf16>
    %c0_42 = arith.constant 0 : index
    %c10 = arith.constant 10 : index
    %c0_43 = arith.constant 0 : index
    %c0_44 = arith.constant 0 : index
    %68 = vector.load %arg5[%c0_42, %c10, %c0_43, %c0_44] : memref<1x12x8x8xbf16, #tpu.memory_space<vmem>>, vector<1x1x8x8xbf16>
    %69 = vector.shape_cast %68 : vector<1x1x8x8xbf16> to vector<8x8xbf16>
    %70 = vector.shape_cast %67 : vector<8x8xbf16> to vector<1x1x8x8xbf16>
    tpu.vector_store %arg5[%c0_42, %c10, %c0_43, %c0_44], %70 {strides = array<i32>} : memref<1x12x8x8xbf16, #tpu.memory_space<vmem>>, vector<1x1x8x8xbf16>,
    %71 = vector.extract_strided_slice %26 {offsets = [0, 88], sizes = [8, 8], strides = [1, 1]} : vector<8x96xbf16> to vector<8x8xbf16>
    %c0_45 = arith.constant 0 : index
    %c11 = arith.constant 11 : index
    %c0_46 = arith.constant 0 : index
    %c0_47 = arith.constant 0 : index
    %72 = vector.load %arg5[%c0_45, %c11, %c0_46, %c0_47] : memref<1x12x8x8xbf16, #tpu.memory_space<vmem>>, vector<1x1x8x8xbf16>
    %73 = vector.shape_cast %72 : vector<1x1x8x8xbf16> to vector<8x8xbf16>
    %74 = vector.shape_cast %71 : vector<8x8xbf16> to vector<1x1x8x8xbf16>
    tpu.vector_store %arg5[%c0_45, %c11, %c0_46, %c0_47], %74 {strides = array<i32>} : memref<1x12x8x8xbf16, #tpu.memory_space<vmem>>, vector<1x1x8x8xbf16>,
    return
  }
  func.func @transform_0(%arg0: i32, %arg1: i32) -> (i32, i32, i32) {
    %c0_i32 = arith.constant 0 : i32
    %c0_i32_0 = arith.constant 0 : i32
    return %arg0, %arg1, %c0_i32 : i32, i32, i32
  }
  func.func @transform_1(%arg0: i32, %arg1: i32) -> (i32, i32) {
    %c0_i32 = arith.constant 0 : i32
    %c0_i32_0 = arith.constant 0 : i32
    %c0_i32_1 = arith.constant 0 : i32
    return %c0_i32, %c0_i32_0 : i32, i32
  }
  func.func @transform_2(%arg0: i32, %arg1: i32) -> (i32, i32) {
    %c0_i32 = arith.constant 0 : i32
    %c0_i32_0 = arith.constant 0 : i32
    %c0_i32_1 = arith.constant 0 : i32
    return %c0_i32, %c0_i32_0 : i32, i32
  }
  func.func @transform_3(%arg0: i32, %arg1: i32) -> (i32, i32, i32, i32) {
    %c0_i32 = arith.constant 0 : i32
    %c0_i32_0 = arith.constant 0 : i32
    %c0_i32_1 = arith.constant 0 : i32
    return %arg0, %c0_i32, %arg1, %c0_i32_0 : i32, i32, i32, i32
  }
}

</mosaic_0001>

<llo_original>
// kernel: tpu_custom_call.1
$region0: #{tpu_custom_call.1}
  #allocation0 [shape = 'u32[]', space=smem, size = 0x4, offset = 0x4, fixed_abs, tag = 'smem constant byte address 0x4 - core index']
  #allocation1 [shape = 'u32[144,128]{1,0:T(1,128)}', space=vmem, size = 0x12000, scoped, tag = 'internal scratch']
  %s0 = inlined_call_operand.hbm [shape: f32[2,8,32], index: 0, kind: input, shape index: {}]
  %s1 = inlined_call_operand.hbm [shape: bf16[32,96], index: 1, kind: input, shape index: {}]
  %s2 = inlined_call_operand.vmem [shape: f32[1,96], index: 2, kind: input, shape index: {}]
  %s3 = inlined_call_operand.vmem [shape: bf16[2,12,8,8], index: 3, kind: output, shape index: {}]
  %s4 = sld [smem:[#allocation0]]
  $region53: #{tpu_custom_call.1} parent=0
    _
  %s6 = ssub.s32 1, %s4
  %s7 = scalar_select 0, %s6, %s4
  $region1: #{tpu_custom_call.1} parent=0
    #allocation2 [shape = 'u8[8192]{0}', space=vmem, size = 0x2000, scoped, tag = 'input window, operand 0']
    #allocation3 [shape = 's32[2]{0}', space=sflag, size = 0x8, scoped, tag = 'scoped memory for tpu_custom_call.1']
    #allocation4 [shape = 'u8[8192]{0}', space=vmem, size = 0x2000, scoped, tag = 'input window, operand 1, single buffered']
    #allocation5 [shape = 's32[1]{0}', space=sflag, size = 0x4, scoped, tag = 'scoped memory for tpu_custom_call.1']
    %8 = vsyncpa [#allocation3], 0
    %s9 = scalar_lea.sflag [#allocation3], 1
    %10 = vsyncpa %s9, 0
    %11 = vsyncpa [#allocation5], 0
    loop: start=0, step=1, limit=4
    $region2: #{tpu_custom_call.1} parent=1 // loop_pre_header
      _
    $region3: #{tpu_custom_call.1} parent=1 // loop_header
      %s13 = sphi 0, %s17
      %p14 = scmp.ge.s32.totalorder %s13, 4
      %s20 = sphi 0, %s32
      %s21 = sphi 0, %s28
      %s22 = sphi 0, %s20
      %s23 = sphi 0, %s21
      %s24 = sphi 0, %s22
      %s25 = sphi 0, %s23
      %s37 = sphi 0, %s39
      %s40 = sphi 0, %s37
      %s41 = sphi 0, %s40
      %s57 = sphi 0, %s41
      %s61 = sphi 0, %s61
      %s63 = sphi 0, %s61
      %s64 = sphi 0, %s63
      %s78 = sphi 0, %s64
      %s82 = sphi 0, %s82
      %s84 = sphi 0, %s82
      %s85 = sphi 0, %s84
      %s99 = sphi 0, %s85
      %s107 = sphi 0, %s109
      %s110 = sphi 0, %s107
      %s111 = sphi 0, %s110
      %s127 = sphi 0, %s111
    $region4: #{tpu_custom_call.1} parent=1 // loop_header_branch
      %16 = sbr.rel (%p14) target = $region8
    $region5: #{tpu_custom_call.1} parent=1 // loop_body
      %s18 = ssub.s32 %s13, 1
      %s19 = ssub.s32 %s13, 2
      %s26 = sadd.s32 1, %s21
      %p27 = scmp.ge.s32.totalorder %s26, 1
      %s28 = scalar_select %p27, 0, %s26
      %s29 = sadd.s32 1, %s20
      %s30 = scalar_select %p27, %s29, %s20
      %p31 = scmp.ge.s32.totalorder %s30, 2
      %s32 = scalar_select %p31, 0, %s30
      %s33 = ssub.s32 %s20, %s32
      %s34 = ssub.s32 %s21, %s28
      %s35 = sor.u32 %s33, %s34
      %p36 = scmp.eq.s32.totalorder %s35, 0
      %s38 = sadd.s32 %s37, 1
      %s39 = scalar_select %p36, %s37, %s38
      %p42 = pneg %p36
      %p43 = scmp.eq.s32.totalorder %s13, 1
      %p44 = por %p42, %p43
      %p45 = scmp.ne.s32.totalorder %s37, %s40
      %p46 = scmp.eq.s32.totalorder %s13, 0
      %p47 = por %p45, %p46
      %p48 = scmp.ne.s32.totalorder %s37, %s40
      %p49 = scmp.eq.s32.totalorder %s18, 1
      %p50 = por %p48, %p49
      %p51 = scmp.ne.s32.totalorder %s40, %s41
      %p52 = scmp.eq.s32.totalorder %s18, 0
      %p53 = por %p51, %p52
      %p54 = scmp.ne.s32.totalorder %s40, %s41
      %p55 = scmp.eq.s32.totalorder %s19, 1
      %p56 = por %p54, %p55
      %p58 = scmp.ne.s32.totalorder %s41, %s57
      %p59 = scmp.eq.s32.totalorder %s19, 0
      %p60 = por %p58, %p59
      %s62 = sadd.s32 %s61, 1
      %p65 = scmp.eq.s32.totalorder %s13, 1
      %p66 = scmp.ne.s32.totalorder %s61, %s63
      %p67 = scmp.eq.s32.totalorder %s13, 0
      %p68 = por %p66, %p67
      %p69 = scmp.ne.s32.totalorder %s61, %s63
      %p70 = scmp.eq.s32.totalorder %s18, 1
      %p71 = por %p69, %p70
      %p72 = scmp.ne.s32.totalorder %s63, %s64
      %p73 = scmp.eq.s32.totalorder %s18, 0
      %p74 = por %p72, %p73
      %p75 = scmp.ne.s32.totalorder %s63, %s64
      %p76 = scmp.eq.s32.totalorder %s19, 1
      %p77 = por %p75, %p76
      %p79 = scmp.ne.s32.totalorder %s64, %s78
      %p80 = scmp.eq.s32.totalorder %s19, 0
      %p81 = por %p79, %p80
      %s83 = sadd.s32 %s82, 1
      %p86 = scmp.eq.s32.totalorder %s13, 1
      %p87 = scmp.ne.s32.totalorder %s82, %s84
      %p88 = scmp.eq.s32.totalorder %s13, 0
      %p89 = por %p87, %p88
      %p90 = scmp.ne.s32.totalorder %s82, %s84
      %p91 = scmp.eq.s32.totalorder %s18, 1
      %p92 = por %p90, %p91
      %p93 = scmp.ne.s32.totalorder %s84, %s85
      %p94 = scmp.eq.s32.totalorder %s18, 0
      %p95 = por %p93, %p94
      %p96 = scmp.ne.s32.totalorder %s84, %s85
      %p97 = scmp.eq.s32.totalorder %s19, 1
      %p98 = por %p96, %p97
      %p100 = scmp.ne.s32.totalorder %s85, %s99
      %p101 = scmp.eq.s32.totalorder %s19, 0
      %p102 = por %p100, %p101
      %s103 = ssub.s32 %s20, %s32
      %s104 = ssub.s32 %s21, %s28
      %s105 = sor.u32 %s103, %s104
      %p106 = scmp.eq.s32.totalorder %s105, 0
      %s108 = sadd.s32 %s107, 1
      %s109 = scalar_select %p106, %s107, %s108
      %p112 = pneg %p106
      %p113 = scmp.eq.s32.totalorder %s13, 1
      %p114 = por %p112, %p113
      %p115 = scmp.ne.s32.totalorder %s107, %s110
      %p116 = scmp.eq.s32.totalorder %s13, 0
      %p117 = por %p115, %p116
      %p118 = scmp.ne.s32.totalorder %s107, %s110
      %p119 = scmp.eq.s32.totalorder %s18, 1
      %p120 = por %p118, %p119
      %p121 = scmp.ne.s32.totalorder %s110, %s111
      %p122 = scmp.eq.s32.totalorder %s18, 0
      %p123 = por %p121, %p122
      %p124 = scmp.ne.s32.totalorder %s110, %s111
      %p125 = scmp.eq.s32.totalorder %s19, 1
      %p126 = por %p124, %p125
      %p128 = scmp.ne.s32.totalorder %s111, %s127
      %p129 = scmp.eq.s32.totalorder %s19, 0
      %p130 = por %p128, %p129
      %p131 = scmp.le.s32.totalorder 1, %s13
      %p132 = scmp.lt.s32.totalorder %s13, 3
      %p133 = pnand %p131, %p132
      %p134 = pneg %p133
      // Predicated region
      $region9: #{tpu_custom_call.1} parent=5 // pred_check
        _
      $region10: #{tpu_custom_call.1} parent=5 // pred_check_branch
        %136 = sbr.rel (%p133) target = $region12
      $region11: #{tpu_custom_call.1} parent=5 // pred_region
        %s137 = ssub.s32 %s13, 1
        // Predicated region
        $region13: #{tpu_custom_call.1} parent=11 // pred_check
          %p138 = pneg %p74
        $region14: #{tpu_custom_call.1} parent=11 // pred_check_branch
          %140 = sbr.rel (%p138) target = $region16
        $region15: #{tpu_custom_call.1} parent=11 // pred_region
          %s142 = ssub.s32 256, 256
          %143 = vsyncadd [#allocation5], %s142
          %s144 = sshll.u32 [#allocation4], 4
          %s145 = int_to_ptr.vmem [resolvable:$true] %s144
          %150 = dma.hbm_to_vmem [thread:$0]  %s1, 256, %s145, [#allocation5], 64, 64, 4
        $region16: #{tpu_custom_call.1} parent=11 // pred_fallthru
          _
        // Predicated region
        $region17: #{tpu_custom_call.1} parent=11 // pred_check
          %p151 = pneg %p95
        $region18: #{tpu_custom_call.1} parent=11 // pred_check_branch
          %153 = sbr.rel (%p151) target = $region20
        $region19: #{tpu_custom_call.1} parent=11 // pred_region
          _
        $region20: #{tpu_custom_call.1} parent=11 // pred_fallthru
          _
      $region12: #{tpu_custom_call.1} parent=5 // pred_fallthru
        _
      %p154 = scmp.lt.s32.totalorder %s13, 2
      // Predicated region
      $region21: #{tpu_custom_call.1} parent=5 // pred_check
        %p155 = pneg %p154
      $region22: #{tpu_custom_call.1} parent=5 // pred_check_branch
        %157 = sbr.rel (%p155) target = $region24
      $region23: #{tpu_custom_call.1} parent=5 // pred_region
        // Predicated region
        $region25: #{tpu_custom_call.1} parent=23 // pred_check
          %p158 = pneg %p47
        $region26: #{tpu_custom_call.1} parent=23 // pred_check_branch
          %160 = sbr.rel (%p158) target = $region28
        $region27: #{tpu_custom_call.1} parent=23 // pred_region
          %s161 = sand.u32 %s37, 1
          %s162 = scalar_lea.sflag [#allocation3], %s161
          %s163 = sand.u32 %s37, 1
          %s164 = smul.addr %s163, 8
          %s165 = scalar_lea.vmem [#allocation2], %s164
          %s167 = ssub.s32 128, 128
          %168 = vsyncadd %s162, %s167
          %s169 = sadd.s32 %s21, %s20
          %s170 = smul.addr %s169, 128
          %s171 = scalar_lea.hbm %s0, %s170
          %s173 = sshll.u32 %s165, 4
          %s174 = int_to_ptr.vmem [resolvable:$true] %s173
          %176 = dma.hbm_to_vmem [thread:$0]  %s171, 128, %s174, %s162
        $region28: #{tpu_custom_call.1} parent=23 // pred_fallthru
          _
      $region24: #{tpu_custom_call.1} parent=5 // pred_fallthru
        _
      %p177 = scmp.le.s32.totalorder 1, %s13
      %p178 = scmp.lt.s32.totalorder %s13, 3
      %p179 = pnand %p177, %p178
      %p180 = pneg %p179
      // Predicated region
      $region29: #{tpu_custom_call.1} parent=5 // pred_check
        _
      $region30: #{tpu_custom_call.1} parent=5 // pred_check_branch
        %182 = sbr.rel (%p179) target = $region32
      $region31: #{tpu_custom_call.1} parent=5 // pred_region
        %s183 = ssub.s32 %s13, 1
        %s184 = sand.u32 %s40, 1
        %s185 = scalar_lea.sflag [#allocation3], %s184
        %s186 = sand.u32 %s40, 1
        %s187 = smul.addr %s186, 8
        %s188 = scalar_lea.vmem [#allocation2], %s187
        // Predicated region
        $region33: #{tpu_custom_call.1} parent=31 // pred_check
          %p189 = pneg %p53
        $region34: #{tpu_custom_call.1} parent=31 // pred_check_branch
          %191 = sbr.rel (%p189) target = $region36
        $region35: #{tpu_custom_call.1} parent=31 // pred_region
          %192 = dma.done %s185, 128
        $region36: #{tpu_custom_call.1} parent=31 // pred_fallthru
          _
        // Predicated region
        $region37: #{tpu_custom_call.1} parent=31 // pred_check
          %p193 = pneg %p74
        $region38: #{tpu_custom_call.1} parent=31 // pred_check_branch
          %195 = sbr.rel (%p193) target = $region40
        $region39: #{tpu_custom_call.1} parent=31 // pred_region
          %196 = dma.done [#allocation5], 256
        $region40: #{tpu_custom_call.1} parent=31 // pred_fallthru
          _
        %s197 = sand.u32 %s40, 1
        %s198 = scalar_lea.sflag [#allocation3], %s197
        %s199 = sand.u32 %s40, 1
        %s200 = smul.addr %s199, 8
        %s201 = scalar_lea.vmem [#allocation2], %s200
        %p202 = pneg %p53
        %p203 = pneg %p50
        %p204 = pneg %p74
        %p205 = pneg %p71
        %p206 = pneg %p95
        %p207 = pneg %p92
        %p208 = pneg %p123
        %p209 = pneg %p120
        %p210 = scmp.lt.s32.totalorder %s22, 1
        %s211 = scalar_select %p210, %s22, 1
        %p212 = scmp.lt.s32.totalorder %s23, 0
        %s213 = scalar_select %p212, %s23, 0
        %s214 = smul.addr %s211, 12
        %s215 = sadd.s32 %s213, %s214
        %s216 = smul.addr %s215, 4
        %s217 = scalar_lea.vmem %s3, %s216
        %p218 = scmp.lt.s32.totalorder %s22, 1
        %s219 = scalar_select %p218, %s22, 1
        %p220 = scmp.lt.s32.totalorder %s23, 0
        %s221 = scalar_select %p220, %s23, 0
        %s222 = smul.addr %s219, 12
        %s223 = sadd.s32 %s221, %s222
        %s224 = smul.addr %s223, 4
        %s225 = scalar_lea.vmem %s3, %s224
        %v227 = vld [vmem:[%s188] sm:$0xff]
        %vm228 = vcmask 261120
        %v229 = vsel %vm228, %v227, 0.0
        %230 = vadd.xlane.f32.xlu0 %v229
        %v231 = vpop.xlane.xlu0 %230
        %v232 = vrcp.pop 32.0
        %v233 = vmul.f32 %v231, %v232
        %v234 = vsub.f32 %v227, %v233
        %v235 = vmul.f32 %v234, %v234
        %v236 = vsel %vm228, %v235, 0.0
        %237 = vadd.xlane.f32.xlu0 %v236
        %v238 = vpop.xlane.xlu0 %237
        %v239 = vmul.f32 %v238, %v232
        %v240 = vadd.f32 %v239, 1e-06
        %v241 = vrsqrt.pop %v240
        %v242 = vmul.f32 %v234, %v241
        %v243 = vpack.c.bf16 %v242, %v242
        %v244 = vld [vmem:[#allocation4] sm:$0xf]
        %v245 = vld [vmem:[#allocation4 + $0x4] sm:$0xf]
        %v246 = vld [vmem:[#allocation4 + $0x8] sm:$0xf]
        %v247 = vld [vmem:[#allocation4 + $0xc] sm:$0xf]
        %v248 = vld [vmem:[%s2] sm:$0x1]
        %v250 = vlaneseq
        %v251 = vshrl.u32 %v250, 7
        %v252 = vsub.s32 0, %v251
        %v253 = vrot.slane %v248, %v252
        %v259 = vunpack.c.l.b16 %v244
        %v260 = vunpack.c.l.b16 %v245
        %v261 = vunpack.c.l.b16 %v246
        %v262 = vunpack.c.l.b16 %v247
        %v263 = vpack.c.b16 %v260, %v259
        %v264 = vpack.c.b16 %v262, %v261
        %v268 = vsel %vm228, %v243, 0
        %270 = vmatprep.subr.bf16.mxu0 0
        %271 = vmatpush1.bf16.msra.mxu0 0
        %272 = vmatprep.subr.bf16.mxu0 0
        %273 = vmatpush1.bf16.msra.mxu0 0
        %274 = vmatprep.subr.bf16.mxu0 0
        %275 = vmatpush1.bf16.msra.mxu0 0
        %276 = vmatprep.subr.bf16.mxu0 0
        %277 = vmatpush1.bf16.msra.mxu0 0
        %278 = vmatprep.subr.bf16.mxu0 0
        %279 = vmatpush1.bf16.msra.mxu0 0
        %280 = vmatprep.subr.bf16.mxu0 0
        %281 = vmatpush1.bf16.msra.mxu0 0
        %282 = vmatprep.subr.bf16.mxu0 0
        %283 = vmatpush1.bf16.msra.mxu0 %v264
        %284 = vmatprep.subr.bf16.mxu0 0
        %285 = vmatpush1.bf16.msra.mxu0 %v263
        %286 = vmatprep.subr.bf16.mxu0 0
        %287 = vmatpush2.bf16.msra.mxu0 0
        %288 = vmatprep.subr.bf16.mxu0 0
        %289 = vmatpush2.bf16.msra.mxu0 0
        %290 = vmatprep.subr.bf16.mxu0 0
        %291 = vmatpush2.bf16.msra.mxu0 0
        %292 = vmatprep.subr.bf16.mxu0 0
        %293 = vmatpush2.bf16.msra.mxu0 0
        %294 = vmatprep.subr.bf16.mxu0 0
        %295 = vmatpush2.bf16.msra.mxu0 0
        %296 = vmatprep.subr.bf16.mxu0 0
        %297 = vmatpush2.bf16.msra.mxu0 0
        %298 = vmatprep.subr.bf16.mxu0 0
        %299 = vmatpush2.bf16.msra.mxu0 0
        %300 = vmatprep.subr.bf16.mxu0 0
        %301 = vmatpush2.bf16.msra.mxu0 0
        %302 = vmatprep.mubr.bf16.mxu0 0
        %303 = vmatmul.mubr.bf16.gmra.mxu0 %v268
        %v304 = vpop.f32.mrf.mxu0
        %v305 = vadd.f32 %v253, %v304
        %v306 = vpop.f32.mrf.mxu0
        %v307 = vpop.f32.mrf.mxu0
        %v308 = vpop.f32.mrf.mxu0
        %309 = vdwg.mxu0
        %v310 = vpack.c.bf16 %v305, %v305
        %vm311 = vcmask 60416
        %312 = vst.msk [vmem:[%s225] sm:$0xf] %vm311, %v310
        %v314 = vunpack.c.l.b16 %v310
        %v315 = vpack.c.b16 %v314, %v314
        %316 = vrot.lane.b32.xlu0 %v315, 120
        %v317 = vpop.permute.xlu0 %316
        %s319 = scalar_lea.vmem %s225, 4
        %320 = vst.msk [vmem:[%s319] sm:$0xf] %vm311, %v317
        %321 = vrot.lane.b32.xlu0 %v315, 112
        %v322 = vpop.permute.xlu0 %321
        %s324 = scalar_lea.vmem %s225, 8
        %325 = vst.msk [vmem:[%s324] sm:$0xf] %vm311, %v322
        %326 = vrot.lane.b32.xlu0 %v315, 104
        %v327 = vpop.permute.xlu0 %326
        %s329 = scalar_lea.vmem %s225, 12
        %330 = vst.msk [vmem:[%s329] sm:$0xf] %vm311, %v327
        %331 = vrot.lane.b32.xlu0 %v315, 96
        %v332 = vpop.permute.xlu0 %331
        %s334 = scalar_lea.vmem %s225, 16
        %335 = vst.msk [vmem:[%s334] sm:$0xf] %vm311, %v332
        %336 = vrot.lane.b32.xlu0 %v315, 88
        %v337 = vpop.permute.xlu0 %336
        %s339 = scalar_lea.vmem %s225, 20
        %340 = vst.msk [vmem:[%s339] sm:$0xf] %vm311, %v337
        %341 = vrot.lane.b32.xlu0 %v315, 80
        %v342 = vpop.permute.xlu0 %341
        %s344 = scalar_lea.vmem %s225, 24
        %345 = vst.msk [vmem:[%s344] sm:$0xf] %vm311, %v342
        %346 = vrot.lane.b32.xlu0 %v315, 72
        %v347 = vpop.permute.xlu0 %346
        %s349 = scalar_lea.vmem %s225, 28
        %350 = vst.msk [vmem:[%s349] sm:$0xf] %vm311, %v347
        %351 = vrot.lane.b32.xlu0 %v315, 64
        %v352 = vpop.permute.xlu0 %351
        %s354 = scalar_lea.vmem %s225, 32
        %355 = vst.msk [vmem:[%s354] sm:$0xf] %vm311, %v352
        %356 = vrot.lane.b32.xlu0 %v315, 56
        %v357 = vpop.permute.xlu0 %356
        %s359 = scalar_lea.vmem %s225, 36
        %360 = vst.msk [vmem:[%s359] sm:$0xf] %vm311, %v357
        %361 = vrot.lane.b32.xlu0 %v315, 48
        %v362 = vpop.permute.xlu0 %361
        %s364 = scalar_lea.vmem %s225, 40
        %365 = vst.msk [vmem:[%s364] sm:$0xf] %vm311, %v362
        %366 = vrot.lane.b32.xlu0 %v315, 40
        %v367 = vpop.permute.xlu0 %366
        %s369 = scalar_lea.vmem %s225, 44
        %370 = vst.msk [vmem:[%s369] sm:$0xf] %vm311, %v367
        %p371 = scmp.lt.s32.totalorder %s22, 1
        %s372 = scalar_select %p371, %s22, 1
        %p373 = scmp.lt.s32.totalorder %s23, 0
        %s374 = scalar_select %p373, %s23, 0
        %s375 = smul.addr %s372, 12
        %s376 = sadd.s32 %s374, %s375
        %s377 = smul.addr %s376, 4
        %s378 = scalar_lea.vmem %s3, %s377
        // Predicated region
        $region41: #{tpu_custom_call.1} parent=31 // pred_check
          %p379 = pneg %p120
        $region42: #{tpu_custom_call.1} parent=31 // pred_check_branch
          %381 = sbr.rel (%p379) target = $region44
        $region43: #{tpu_custom_call.1} parent=31 // pred_region
          _
        $region44: #{tpu_custom_call.1} parent=31 // pred_fallthru
          _
      $region32: #{tpu_custom_call.1} parent=5 // pred_fallthru
        _
      %p382 = scmp.le.s32.totalorder 2, %s13
      // Predicated region
      $region45: #{tpu_custom_call.1} parent=5 // pred_check
        %p383 = pneg %p382
      $region46: #{tpu_custom_call.1} parent=5 // pred_check_branch
        %385 = sbr.rel (%p383) target = $region48
      $region47: #{tpu_custom_call.1} parent=5 // pred_region
        %s386 = ssub.s32 %s13, 2
        // Predicated region
        $region49: #{tpu_custom_call.1} parent=47 // pred_check
          %p387 = pneg %p126
        $region50: #{tpu_custom_call.1} parent=47 // pred_check_branch
          %389 = sbr.rel (%p387) target = $region52
        $region51: #{tpu_custom_call.1} parent=47 // pred_region
          %p390 = scmp.lt.s32.totalorder %s24, 1
          %s391 = scalar_select %p390, %s24, 1
          %p392 = scmp.lt.s32.totalorder %s25, 0
          %s393 = scalar_select %p392, %s25, 0
          %s394 = smul.addr %s391, 12
          %s395 = sadd.s32 %s393, %s394
          %s396 = smul.addr %s395, 4
          %s397 = scalar_lea.vmem %s3, %s396
        $region52: #{tpu_custom_call.1} parent=47 // pred_fallthru
          _
      $region48: #{tpu_custom_call.1} parent=5 // pred_fallthru
        _
    $region6: #{tpu_custom_call.1} parent=1 // loop_footer
      %s17 = sadd.s32 1, %s13
    $region7: #{tpu_custom_call.1} parent=1 // loop_footer_branch
      %12 = sbr.rel target = $region3
    $region8: #{tpu_custom_call.1} parent=1 // loop_exit
      _
    %398 = vsyncpa [#allocation3], 1
    %s399 = scalar_lea.sflag [#allocation3], 1
    %400 = vsyncpa %s399, 1
    %401 = vsyncpa [#allocation5], 1

</llo_original>
